<compile_context>
chip_gen: v7x
topology: tpu7x:2x2x1
jax: 0.10.0
libtpu: 0.0.40
codegen_flags: <defaults>
</compile_context>

<pallas_src>
import functools

import jax
import jax.numpy as jnp
from jax.experimental import pallas as pl
from jax.experimental.pallas import tpu as pltpu


# ----------------------------- helpers ---------------------------------------

def _pick_group(rows, target):
    """Smallest divisor of `rows` >= target (bounded), else largest divisor <= target."""
    if target <= 1:
        return 1
    hi = min(rows, 8 * target)
    for g in range(target, hi + 1):
        if rows % g == 0:
            return g
    for g in range(min(target, rows), 0, -1):
        if rows % g == 0:
            return g
    return 1


# ----------------------------- nearest upsample -----------------------------

def _nearest_kernel(x_ref, k_ref, o_ref):
    # One lane-dense one-hot matmul (exact for f32) + one full-width store.
    o_ref[...] = jnp.dot(x_ref[...].astype(jnp.float32), k_ref[...],
                         preferred_element_type=jnp.float32).astype(o_ref.dtype)


def nearest_upsample(x, scale):
    n, c, h, w = x.shape
    ho, wo = h * scale, w * scale
    rows = n * c * h
    out_w = scale * wo                      # scale H-copies of one upsampled row

    # Lane packing: group g input rows per kernel row so the output store is
    # >= 128 lanes (unmasked vst).  g must divide rows so reshapes stay free.
    g = _pick_group(rows, -(-128 // out_w)) if out_w < 128 else 1
    rows_p = rows // g

    # Replication matrix:
    #   kcol[i, j]  = (j // scale == i)                  (W replication)
    #   kcol2       = tile(kcol, (1, scale))             (H replication folded in)
    #   krep        = kron(I_g, kcol2)                   (row packing, block diag)
    kcol = (jnp.arange(wo)[None, :] // scale == jnp.arange(w)[:, None]
            ).astype(jnp.float32)
    kcol2 = jnp.tile(kcol, (1, scale))                         # (w, scale*wo)
    krep = jnp.kron(jnp.eye(g, dtype=jnp.float32), kcol2)      # (g*w, g*out_w)

    x2 = x.reshape(rows_p, g * w)

    # Big mem-bound tiles: full extent if it fits, else 512 rows (multiple of 8)
    # with a cdiv grid (Pallas clips the ragged last block; rows are independent).
    tb = rows_p if rows_p <= 512 else 512
    grid = (pl.cdiv(rows_p, tb),)

    flops = 2 * rows_p * (g * w) * (g * out_w)
    bytes_accessed = 4 * (x2.size + krep.size + rows_p * g * out_w)

    out = pl.pallas_call(
        _nearest_kernel,
        out_shape=jax.ShapeDtypeStruct((rows_p, g * out_w), x.dtype),
        grid_spec=pltpu.PrefetchScalarGridSpec(
            num_scalar_prefetch=0,
            grid=grid,
            in_specs=[
                pl.BlockSpec((tb, g * w), lambda i: (i, 0)),
                pl.BlockSpec((g * w, g * out_w), lambda i: (0, 0)),  # VMEM resident
            ],
            out_specs=pl.BlockSpec((tb, g * out_w), lambda i: (i, 0)),
        ),
        compiler_params=pltpu.CompilerParams(
            dimension_semantics=("parallel",)),
        cost_estimate=pl.CostEstimate(flops=flops, transcendentals=0,
                                      bytes_accessed=int(bytes_accessed)),
    )(x2, krep)
    # (rows_p, g*out_w) == (n, c, h, scale, wo) element order -> free reshape.
    return out.reshape(n, c, ho, wo)


# -------------------- ConvTranspose2d(k=4, stride=2, pad=1) -----------------

# 3x3 neighbourhood shifts used by the phase decomposition.
_SHIFTS = ((-1, -1), (-1, 0), (-1, 1),
           (0, -1), (0, 0), (0, 1),
           (1, -1), (1, 0), (1, 1))


def _convt_kernel(x_ref, w_ref, b_ref, o_ref, patch_ref, *, cin, npix_pad, wp, halo):
    # im2col over the zero-padded image: every tap is a plain static-offset
    # lane slice of the halo-extended flat input (no masks, no doubled buffer).
    for si, (dy, dx) in enumerate(_SHIFTS):
        start = halo + dy * wp + dx
        patch_ref[pl.ds(si * cin, cin), :] = (
            x_ref[:, pl.ds(start, npix_pad)].astype(patch_ref.dtype))
    # All 4 output phases x all output channels in ONE fused MXU matmul.
    out = jnp.dot(w_ref[...], patch_ref[...], preferred_element_type=jnp.float32)
    o_ref[...] = (out + b_ref[...]).astype(o_ref.dtype)


def conv_transpose2d(x, weight, bias, use_bf16=False):
    """weight: (cin, cout, 4, 4) (torch ConvTranspose2d layout), bias: (cout,)."""
    n, cin, h, w = x.shape
    cout = weight.shape[1]
    ho, wo = 2 * h, 2 * w
    hp, wp = h + 2, w + 2
    npix_pad = hp * wp
    halo = wp + 1                              # max |dy*wp + dx| over the 9 taps
    npix_ext = npix_pad + 2 * halo

    cdtype = jnp.bfloat16 if use_bf16 else jnp.float32

    # Phase-decomposed weights (hoisted, no in-kernel index math):
    # out[co, 2p+ry, 2q+rx] = bias[co] +
    #   sum_{dy,dx,ci} W[ci, co, ry+1-2dy, rx+1-2dx] * x[ci, p+dy, q+dx]
    w_all = jnp.zeros((4 * cout, 9 * cin), jnp.float32)
    for ry in range(2):
        for rx in range(2):
            ph = ry * 2 + rx
            for si, (dy, dx) in enumerate(_SHIFTS):
                kh = ry + 1 - 2 * dy
                kw = rx + 1 - 2 * dx
                if 0 <= kh < 4 and 0 <= kw < 4:
                    blk = weight[:, :, kh, kw].T.astype(jnp.float32)  # (cout, cin)
                    w_all = w_all.at[ph * cout:(ph + 1) * cout,
                                     si * cin:(si + 1) * cin].set(blk)
    w_all = w_all.astype(cdtype)
    b_all = jnp.tile(bias.astype(jnp.float32), 4).reshape(4 * cout, 1)

    # Zero-pad spatially, flatten, add a flat zero halo so every tap shift is a
    # fully in-bounds static slice (the pad-ring output columns are discarded).
    xp = jnp.pad(x, ((0, 0), (0, 0), (1, 1), (1, 1))).reshape(n, cin, npix_pad)
    x_ext = jnp.pad(xp, ((0, 0), (0, 0), (halo, halo))).astype(cdtype)

    esize = 2 if use_bf16 else 4
    ws_bytes = (2 * cin * npix_ext * esize          # input  (double-buffered)
                + 2 * 4 * cout * 9 * cin * esize    # weights
                + 2 * 4 * cout * 4                  # bias
                + 2 * 4 * cout * npix_pad * 4       # output (double-buffered)
                + 9 * cin * npix_pad * esize)       # patch scratch
    vmem_limit = int(min(max(2 * ws_bytes, 8 << 20), 64 << 20))

    flops = 2 * n * (4 * cout) * (9 * cin) * npix_pad
    bytes_accessed = (x_ext.size * esize + w_all.size * esize
                      + n * 4 * cout * npix_pad * 4)

    out_ph = pl.pallas_call(
        functools.partial(_convt_kernel, cin=cin, npix_pad=npix_pad, wp=wp, halo=halo),
        out_shape=jax.ShapeDtypeStruct((n, 4 * cout, npix_pad), x.dtype),
        grid_spec=pltpu.PrefetchScalarGridSpec(
            num_scalar_prefetch=0,
            grid=(n,),
            in_specs=[
                pl.BlockSpec((None, cin, npix_ext), lambda i: (i, 0, 0)),   # batch squeezed
                pl.BlockSpec((4 * cout, 9 * cin), lambda i: (0, 0)),        # VMEM resident
                pl.BlockSpec((4 * cout, 1), lambda i: (0, 0)),
            ],
            out_specs=pl.BlockSpec((None, 4 * cout, npix_pad), lambda i: (i, 0, 0)),
            scratch_shapes=[
                pltpu.VMEM((9 * cin, npix_pad), cdtype),     # im2col patches
            ],
        ),
        compiler_params=pltpu.CompilerParams(
            dimension_semantics=("parallel",),
            vmem_limit_bytes=vmem_limit),
        cost_estimate=pl.CostEstimate(flops=flops, transcendentals=0,
                                      bytes_accessed=int(bytes_accessed)),
    )(x_ext, w_all, b_all)

    # Drop the pad ring, interleave the 4 phases back to NCHW (layout plumbing,
    # once, outside the kernel).
    out = out_ph.reshape(n, 2, 2, cout, hp, wp)[:, :, :, :, 1:h + 1, 1:w + 1]
    out = jnp.transpose(out, (0, 3, 4, 1, 5, 2)).reshape(n, cout, ho, wo)
    return out


# --------------------------------- module ------------------------------------

class Upsample:
    """Pallas equivalent of BEGAN Upsample(in_channel, out_channel, use_conv, scale)."""

    def __init__(self, in_channel, out_channel, use_conv=False, scale=2, key=None):
        self.scale = scale
        self.use_conv = use_conv
        if use_conv:
            key = jax.random.PRNGKey(0) if key is None else key
            kw_key, kb_key = jax.random.split(key)
            fan_in = in_channel * 4 * 4
            bound = 1.0 / (fan_in ** 0.5)
            # torch ConvTranspose2d weight layout: (in_channel, out_channel, 4, 4)
            self.weight = jax.random.uniform(
                kw_key, (in_channel, out_channel, 4, 4), jnp.float32, -bound, bound)
            self.bias = jax.random.uniform(
                kb_key, (out_channel,), jnp.float32, -bound, bound)

    def __call__(self, x):
        if self.use_conv:
            return conv_transpose2d(x, self.weight, self.bias)
        return nearest_upsample(x, self.scale)


# ------------------------------ reference (JAX) ------------------------------

def ref_nearest(x, scale):
    return jnp.repeat(jnp.repeat(x, scale, axis=2), scale, axis=3)


def ref_convt(x, weight, bias):
    n, cin, h, w = x.shape
    cout = weight.shape[1]
    out = jnp.zeros((n, cout, 2 * h + 2, 2 * w + 2), jnp.float32)
    for kh in range(4):
        for kw in range(4):
            contrib = jnp.einsum('nchw,co->nohw', x, weight[:, :, kh, kw])
            out = out.at[:, :, kh:kh + 2 * h:2, kw:kw + 2 * w:2].add(contrib)
    out = out[:, :, 1:2 * h + 1, 1:2 * w + 1]
    return out + bias[None, :, None, None]


if __name__ == "__main__":
    key = jax.random.PRNGKey(0)
    kx, kp = jax.random.split(key)
    x = jax.random.normal(kx, (2, 4, 16, 16), jnp.float32)

    # nearest-neighbor path (use_conv=False)
    up = Upsample(4, 4, use_conv=False, scale=2)
    y0 = jax.block_until_ready(up(x))
    assert y0.shape == (2, 4, 32, 32)
    assert jnp.allclose(y0, ref_nearest(x, 2), atol=1e-5, rtol=1e-5)

    # transposed-conv path (use_conv=True)
    upc = Upsample(4, 8, use_conv=True, scale=2, key=kp)
    y1 = jax.block_until_ready(upc(x))
    assert y1.shape == (2, 8, 32, 32)
    assert jnp.allclose(y1, ref_convt(x, upc.weight, upc.bias),
                        atol=1e-4, rtol=1e-4)

    print("KERNEL_OK")
</pallas_src>

<mosaic_0001>
module attributes {stable_mosaic.version = 11 : i64} {
  func.func @_nearest_kernel(%arg0: i32, %arg1: memref<64x32xf32, #tpu.memory_space<vmem>>, %arg2: memref<32x128xf32, #tpu.memory_space<vmem>>, %arg3: memref<64x128xf32, #tpu.memory_space<vmem>>) attributes {dimension_semantics = [#tpu.dimension_semantics<parallel>], iteration_bounds = array<i64: 1>, scalar_prefetch = 0 : i64, scratch_operands = 0 : i64, tpu.core_type = #tpu.core_type<tc>, window_params = [{transform_indices = @transform_0, window_bounds = array<i64: 64, 32>}, {pipeline_mode = #tpu.pipeline_mode<synchronous>, transform_indices = @transform_1, window_bounds = array<i64: 32, 128>}, {transform_indices = @transform_2, window_bounds = array<i64: 64, 128>}]} {
    %c0 = arith.constant 0 : index
    %c0_0 = arith.constant 0 : index
    %0 = vector.load %arg1[%c0, %c0_0] : memref<64x32xf32, #tpu.memory_space<vmem>>, vector<64x32xf32>
    %c0_1 = arith.constant 0 : index
    %c0_2 = arith.constant 0 : index
    %1 = vector.load %arg2[%c0_1, %c0_2] : memref<32x128xf32, #tpu.memory_space<vmem>>, vector<32x128xf32>
    %cst = arith.constant dense<0.000000e+00> : vector<64x128xf32>
    %2 = tpu.matmul %0, %1, %cst {dimension_numbers = #tpu.dot_dimension_numbers<[1], [0], [0], [1], [0, 0, 1, 1], [], []>} : vector<64x32xf32>, vector<32x128xf32>, vector<64x128xf32> -> vector<64x128xf32>
    %c0_3 = arith.constant 0 : index
    %c0_4 = arith.constant 0 : index
    %3 = vector.load %arg3[%c0_3, %c0_4] : memref<64x128xf32, #tpu.memory_space<vmem>>, vector<64x128xf32>
    tpu.vector_store %arg3[%c0_3, %c0_4], %2 {strides = array<i32>} : memref<64x128xf32, #tpu.memory_space<vmem>>, vector<64x128xf32>,
    return
  }
  func.func @transform_0(%arg0: i32) -> (i32, i32) {
    %c0_i32 = arith.constant 0 : i32
    %c0_i32_0 = arith.constant 0 : i32
    return %arg0, %c0_i32 : i32, i32
  }
  func.func @transform_1(%arg0: i32) -> (i32, i32) {
    %c0_i32 = arith.constant 0 : i32
    %c0_i32_0 = arith.constant 0 : i32
    %c0_i32_1 = arith.constant 0 : i32
    return %c0_i32, %c0_i32_0 : i32, i32
  }
  func.func @transform_2(%arg0: i32) -> (i32, i32) {
    %c0_i32 = arith.constant 0 : i32
    %c0_i32_0 = arith.constant 0 : i32
    return %arg0, %c0_i32 : i32, i32
  }
}

</mosaic_0001>

<llo_original>
// kernel: tpu_custom_call.1
$region0: #{tpu_custom_call.1}
  #allocation0 [shape = 'u32[]', space=smem, size = 0x4, offset = 0x4, fixed_abs, tag = 'smem constant byte address 0x4 - core index']
  #allocation1 [shape = 'u32[144,128]{1,0:T(1,128)}', space=vmem, size = 0x12000, scoped, tag = 'internal scratch']
  %s0 = inlined_call_operand.vmem [shape: f32[64,32], index: 0, kind: input, shape index: {}]
  %s1 = inlined_call_operand.vmem [shape: f32[32,128], index: 1, kind: input, shape index: {}]
  %s2 = inlined_call_operand.hbm [shape: f32[64,128], index: 2, kind: output, shape index: {}]
  %s3 = sld [smem:[#allocation0]]
  $region18: #{tpu_custom_call.1} parent=0
    _
  %s5 = ssub.s32 1, %s3
  %s6 = scalar_select 0, %s5, %s3
  $region1: #{tpu_custom_call.1} parent=0
    #allocation2 [shape = 'u8[32768]{0}', space=vmem, size = 0x8000, scoped, tag = 'output window, operand 0, single buffered']
    #allocation3 [shape = 's32[1]{0}', space=sflag, size = 0x4, scoped, tag = 'scoped memory for tpu_custom_call.1']
    %7 = vsyncpa [#allocation3], 0
    // Predicated region
    $region2: #{tpu_custom_call.1} parent=1 // pred_check
      _
    $region3: #{tpu_custom_call.1} parent=1 // pred_check_branch
      %9 = sbr.rel (0) target = $region5
    $region4: #{tpu_custom_call.1} parent=1 // pred_region
      _
    $region5: #{tpu_custom_call.1} parent=1 // pred_fallthru
      _
    // Predicated region
    $region6: #{tpu_custom_call.1} parent=1 // pred_check
      _
    $region7: #{tpu_custom_call.1} parent=1 // pred_check_branch
      %11 = sbr.rel (0) target = $region9
    $region8: #{tpu_custom_call.1} parent=1 // pred_region
      _
    $region9: #{tpu_custom_call.1} parent=1 // pred_fallthru
      _
    %v12 = vld [vmem:[%s0] sm:$0xff]
    %v13 = vld [vmem:[%s0 + $0x8] sm:$0xff]
    %v14 = vld [vmem:[%s0 + $0x10] sm:$0xff]
    %v15 = vld [vmem:[%s0 + $0x18] sm:$0xff]
    %v16 = vld [vmem:[%s0 + $0x20] sm:$0xff]
    %v17 = vld [vmem:[%s0 + $0x28] sm:$0xff]
    %v18 = vld [vmem:[%s0 + $0x30] sm:$0xff]
    %v19 = vld [vmem:[%s0 + $0x38] sm:$0xff]
    %v20 = vld [vmem:[%s1] sm:$0xff]
    %v21 = vld [vmem:[%s1 + $0x8] sm:$0xff]
    %v22 = vld [vmem:[%s1 + $0x10] sm:$0xff]
    %v23 = vld [vmem:[%s1 + $0x18] sm:$0xff]
    %vm24 = vcmask 261120
    %v26 = vsel %vm24, %v12, 0
    %v29 = vsel %vm24, %v13, 0
    %v32 = vsel %vm24, %v14, 0
    %v35 = vsel %vm24, %v15, 0
    %v38 = vsel %vm24, %v16, 0
    %v41 = vsel %vm24, %v17, 0
    %v44 = vsel %vm24, %v18, 0
    %v47 = vsel %vm24, %v19, 0
    %49 = vmatprep.subr.mxu0 0.0
    %50 = vmatpush1.msra.mxu0 %v20
    %51 = vmatprep.subr.mxu0 0.0
    %52 = vmatpush1.msra.mxu0 %v21
    %53 = vmatprep.subr.mxu0 0.0
    %54 = vmatpush1.msra.mxu0 %v22
    %55 = vmatprep.subr.mxu0 0.0
    %56 = vmatpush1.msra.mxu0 %v23
    %57 = vmatprep.subr.mxu0 0.0
    %58 = vmatpush1.msra.mxu0 0.0
    %59 = vmatprep.subr.mxu0 0.0
    %60 = vmatpush1.msra.mxu0 0.0
    %61 = vmatprep.subr.mxu0 0.0
    %62 = vmatpush1.msra.mxu0 0.0
    %63 = vmatprep.subr.mxu0 0.0
    %64 = vmatpush1.msra.mxu0 0.0
    %65 = vmatprep.subr.mxu0 0.0
    %66 = vmatpush1.msra.mxu0 0.0
    %67 = vmatprep.subr.mxu0 0.0
    %68 = vmatpush1.msra.mxu0 0.0
    %69 = vmatprep.subr.mxu0 0.0
    %70 = vmatpush1.msra.mxu0 0.0
    %71 = vmatprep.subr.mxu0 0.0
    %72 = vmatpush1.msra.mxu0 0.0
    %73 = vmatprep.subr.mxu0 0.0
    %74 = vmatpush1.msra.mxu0 0.0
    %75 = vmatprep.subr.mxu0 0.0
    %76 = vmatpush1.msra.mxu0 0.0
    %77 = vmatprep.subr.mxu0 0.0
    %78 = vmatpush1.msra.mxu0 0.0
    %79 = vmatprep.subr.mxu0 0.0
    %80 = vmatpush1.msra.mxu0 0.0
    %81 = vmatprep.subr.mxu0 0.0
    %82 = vmatpush1.msra.mxu0 0.0
    %83 = vmatprep.subr.mxu0 0.0
    %84 = vmatpush1.msra.mxu0 0.0
    %85 = vmatprep.subr.mxu0 0.0
    %86 = vmatpush1.msra.mxu0 0.0
    %87 = vmatprep.subr.mxu0 0.0
    %88 = vmatpush1.msra.mxu0 0.0
    %89 = vmatprep.subr.mxu0 0.0
    %90 = vmatpush1.msra.mxu0 0.0
    %91 = vmatprep.subr.mxu0 0.0
    %92 = vmatpush1.msra.mxu0 0.0
    %93 = vmatprep.subr.mxu0 0.0
    %94 = vmatpush1.msra.mxu0 0.0
    %95 = vmatprep.subr.mxu0 0.0
    %96 = vmatpush1.msra.mxu0 0.0
    %97 = vmatprep.subr.mxu0 0.0
    %98 = vmatpush1.msra.mxu0 0.0
    %99 = vmatprep.subr.mxu0 0.0
    %100 = vmatpush1.msra.mxu0 0.0
    %101 = vmatprep.subr.mxu0 0.0
    %102 = vmatpush1.msra.mxu0 0.0
    %103 = vmatprep.subr.mxu0 0.0
    %104 = vmatpush1.msra.mxu0 0.0
    %105 = vmatprep.subr.mxu0 0.0
    %106 = vmatpush1.msra.mxu0 0.0
    %107 = vmatprep.subr.mxu0 0.0
    %108 = vmatpush1.msra.mxu0 0.0
    %109 = vmatprep.subr.mxu0 0.0
    %110 = vmatpush1.msra.mxu0 0.0
    %111 = vmatprep.subr.mxu0 0.0
    %112 = vmatpush1.msra.mxu0 0.0
    %113 = vmatprep.mubr.f32.mxu0 0.0
    %114 = vmatmul.mubr.f32.gmra.mrb[0].mxu0 %v26
    %v115 = vpop.f32.mrb[0].mxu0
    %v116 = vadd.f32 0.0, %v115
    %v117 = vpop.f32.mrb[0].mxu0
    %118 = vmatprep.mubr.f32.mxu0 0.0
    %119 = vmatmul.mubr.f32.gmra.mrb[0].mxu0 %v29
    %v120 = vpop.f32.mrb[0].mxu0
    %v121 = vadd.f32 0.0, %v120
    %v122 = vpop.f32.mrb[0].mxu0
    %123 = vmatprep.mubr.f32.mxu0 0.0
    %124 = vmatmul.mubr.f32.gmra.mrb[0].mxu0 %v32
    %v125 = vpop.f32.mrb[0].mxu0
    %v126 = vadd.f32 0.0, %v125
    %v127 = vpop.f32.mrb[0].mxu0
    %128 = vmatprep.mubr.f32.mxu0 0.0
    %129 = vmatmul.mubr.f32.gmra.mrb[0].mxu0 %v35
    %v130 = vpop.f32.mrb[0].mxu0
    %v131 = vadd.f32 0.0, %v130
    %v132 = vpop.f32.mrb[0].mxu0
    %133 = vmatprep.mubr.f32.mxu0 0.0
    %134 = vmatmul.mubr.f32.gmra.mrb[0].mxu0 %v38
    %v135 = vpop.f32.mrb[0].mxu0
    %v136 = vadd.f32 0.0, %v135
    %v137 = vpop.f32.mrb[0].mxu0
    %138 = vmatprep.mubr.f32.mxu0 0.0
    %139 = vmatmul.mubr.f32.gmra.mrb[0].mxu0 %v41
    %v140 = vpop.f32.mrb[0].mxu0
    %v141 = vadd.f32 0.0, %v140
    %v142 = vpop.f32.mrb[0].mxu0
    %143 = vmatprep.mubr.f32.mxu0 0.0
    %144 = vmatmul.mubr.f32.gmra.mrb[0].mxu0 %v44
    %v145 = vpop.f32.mrb[0].mxu0
    %v146 = vadd.f32 0.0, %v145
    %v147 = vpop.f32.mrb[0].mxu0
    %148 = vmatprep.mubr.f32.mxu0 0.0
    %149 = vmatmul.mubr.f32.gmra.mrb[0].mxu0 %v47
    %v150 = vpop.f32.mrb[0].mxu0
    %v151 = vadd.f32 0.0, %v150
    %v152 = vpop.f32.mrb[0].mxu0
    %153 = vdwg.mxu0
    %154 = vst [vmem:[#allocation2] sm:$0xff] %v116
    %155 = vst [vmem:[#allocation2 + $0x8] sm:$0xff] %v121
    %156 = vst [vmem:[#allocation2 + $0x10] sm:$0xff] %v126
    %157 = vst [vmem:[#allocation2 + $0x18] sm:$0xff] %v131
    %158 = vst [vmem:[#allocation2 + $0x20] sm:$0xff] %v136
    %159 = vst [vmem:[#allocation2 + $0x28] sm:$0xff] %v141
    %160 = vst [vmem:[#allocation2 + $0x30] sm:$0xff] %v146
    %161 = vst [vmem:[#allocation2 + $0x38] sm:$0xff] %v151
    // Predicated region
    $region10: #{tpu_custom_call.1} parent=1 // pred_check
      _
    $region11: #{tpu_custom_call.1} parent=1 // pred_check_branch
      %163 = sbr.rel (0) target = $region13
    $region12: #{tpu_custom_call.1} parent=1 // pred_region
      %s165 = ssub.s32 1024, 1024
      %166 = vsyncadd [#allocation3], %s165
      %s167 = sshll.u32 [#allocation2], 4
      %s168 = int_to_ptr.vmem [resolvable:$true] %s167
      %173 = dma.vmem_to_hbm [thread:$0]  %s168, 1024, %s2, [#allocation3], 128, 128, 8
    $region13: #{tpu_custom_call.1} parent=1 // pred_fallthru
      _
    // Predicated region
    $region14: #{tpu_custom_call.1} parent=1 // pred_check
      _
    $region15: #{tpu_custom_call.1} parent=1 // pred_check_branch
      %175 = sbr.rel (0) target = $region17
    $region16: #{tpu_custom_call.1} parent=1 // pred_region
      %176 = dma.done [#allocation3], 1024
    $region17: #{tpu_custom_call.1} parent=1 // pred_fallthru
      _
    %177 = vsyncpa [#allocation3], 1

</llo_original>
